<compile_context>
chip_gen: v6e
topology: v6e:2x2x1
jax: 0.10.0
libtpu: 0.0.40
codegen_flags: <defaults>
</compile_context>

<pallas_src>
import functools

import numpy as np
import jax
import jax.numpy as jnp
from jax.experimental import pallas as pl
from jax.experimental.pallas import tpu as pltpu

LANE = 128        # lane (last-dim) padding target
MAX_TILE_M = 1024  # hard cap on the batch tile


def _round_up(n, m):
    return ((n + m - 1) // m) * m


def _sublane(dtype):
    # vreg sublanes hold 32 bits; sub-32-bit dtypes pack rows, so align the batch
    # tile to 8 (f32), 16 (bf16/f16), 32 (int8/fp8).
    return max(8, 32 // np.dtype(dtype).itemsize)


def _vmem_capacity_bytes():
    # Per-generation VMEM (v5e/v6e: 128 MiB, v7x: 64 MiB per TensorCore).
    try:
        cap = getattr(pltpu.get_tpu_info(), "vmem_capacity_bytes", None)
        if cap:
            return int(cap)
    except Exception:
        pass
    return 64 << 20  # conservative (v7x-sized) fallback


def simplenn_kernel(x_ref, w1_ref, b1_ref, w2_ref, b2_ref, out_ref):
    """One batch tile: out = relu(x @ W1 + b1) @ W2 + b2 (feature dims lane-padded)."""
    h = jnp.dot(x_ref[...], w1_ref[...], preferred_element_type=jnp.float32)
    h = jnp.maximum(h + b1_ref[...], 0.0)                 # f32 bias + ReLU on the VPU
    o = jnp.dot(h.astype(w2_ref.dtype), w2_ref[...],
                preferred_element_type=jnp.float32)
    out_ref[...] = (o + b2_ref[...]).astype(out_ref.dtype)


def prepare_params(params, compute_dtype=jnp.bfloat16, lane=LANE):
    """One-time layout prep, hoisted out of the forward path:
    transpose PyTorch (out, in) weights to (in, out), make biases (1, out) f32,
    and zero-pad every feature dim to a multiple of `lane`.  Padded rows/cols/lanes
    are inert zeros, so the sliced result matches the unpadded math.
    bf16 is the default compute dtype (f32 accumulation stays inside the kernel);
    pass jnp.float32 for bit-tighter results.  On v6e/v7x, lane=256 can improve MXU
    utilisation for mid-sized MXU-bound layers (keep 128 on v5e / DMA-bound cases)."""
    (w1, b1), (w2, b2) = params
    in_dim, hid_dim = w1.shape[1], w1.shape[0]
    out_dim = w2.shape[0]
    k_pad, h_pad, n_pad = (_round_up(d, lane) for d in (in_dim, hid_dim, out_dim))

    def pad2(a, rows, cols):
        return jnp.pad(a, ((0, rows - a.shape[0]), (0, cols - a.shape[1])))

    w1t = pad2(w1.T.astype(compute_dtype), k_pad, h_pad)
    w2t = pad2(w2.T.astype(compute_dtype), h_pad, n_pad)
    b1r = pad2(b1.reshape(1, -1).astype(jnp.float32), 1, h_pad)
    b2r = pad2(b2.reshape(1, -1).astype(jnp.float32), 1, n_pad)
    dims = dict(in_dim=in_dim, out_dim=out_dim, k_pad=k_pad, h_pad=h_pad, n_pad=n_pad)
    return (w1t, b1r, w2t, b2r), dims


def _pick_tile_m(batch, k_pad, h_pad, n_pad, x_bytes, out_bytes,
                 resident_bytes, vmem_budget, sublane):
    if batch <= sublane:
        return batch                                     # single block == full batch dim
    # VMEM left for streamed tiles after the resident weights/biases.
    avail = max(vmem_budget - resident_bytes, sublane * 1024)
    # Per batch-row bytes: double-buffered x and out tiles plus f32 intermediates.
    per_row = 2 * k_pad * x_bytes + 2 * n_pad * out_bytes + 4 * (h_pad + n_pad)
    cap = (avail // per_row) // sublane * sublane
    cap = max(sublane, min(cap, MAX_TILE_M))
    m_aligned = _round_up(batch, sublane)
    if m_aligned <= cap:
        # Whole batch fits one tile: still split into >= 2 blocks so ("parallel",)
        # can shard the batch across both TensorCores on v7x.
        return _round_up(-(-m_aligned // 2), sublane)
    return min(cap, m_aligned)


@functools.partial(
    jax.jit,
    static_argnames=("in_dim", "out_dim", "k_pad", "h_pad", "n_pad",
                     "single_buffer_weights"))
def _forward_impl(x, w1t, b1r, w2t, b2r, *, in_dim, out_dim, k_pad, h_pad, n_pad,
                  single_buffer_weights=True):
    batch = x.shape[0]
    w_bytes = np.dtype(w1t.dtype).itemsize
    x_bytes = w_bytes                                   # x is cast to the weight dtype
    out_dtype = x.dtype                                 # preserve module output dtype
    out_bytes = np.dtype(out_dtype).itemsize

    # --- VMEM budgeting -------------------------------------------------------
    vmem_limit = min(int(_vmem_capacity_bytes() * 0.85), 127 << 20)
    weight_buffers = 1 if single_buffer_weights else 2
    resident_bytes = ((k_pad * h_pad + h_pad * n_pad) * w_bytes
                      + (h_pad + n_pad) * 4) * weight_buffers
    if resident_bytes > vmem_limit // 2:
        # TODO(synk): add a contraction-tiled fallback (grid over K/hidden with an f32
        # VMEM accumulator + pl.when init/finalize) for layers whose weights do not fit
        # the resident-VMEM budget (threshold is half as large on v7x as on v5e/v6e).
        raise NotImplementedError(
            f"SimpleNN weights ({resident_bytes} B) exceed the resident-VMEM budget "
            f"({vmem_limit // 2} B); a contraction-tiled variant is required.")

    sublane = _sublane(w1t.dtype)
    tile_m = _pick_tile_m(batch, k_pad, h_pad, n_pad, x_bytes, out_bytes,
                          resident_bytes, int(vmem_limit * 0.75), sublane)
    grid = (pl.cdiv(batch, tile_m),)

    # Cast once; zero-pad the feature dim only when in_dim is not lane-aligned.
    # The batch dim is never padded: the ragged last tile relies on Pallas's masked
    # edge-block handling (rows are independent; OOB output rows are dropped).
    xp = x.astype(w1t.dtype)
    if k_pad != in_dim:
        xp = jnp.pad(xp, ((0, 0), (0, k_pad - in_dim)))

    def resident(a):
        if single_buffer_weights:
            return pl.BlockSpec(a.shape, lambda i: (0, 0),
                                pipeline_mode=pl.Buffered(1))
        return pl.BlockSpec(a.shape, lambda i: (0, 0))

    flops = 2 * batch * (k_pad * h_pad + h_pad * n_pad)
    bytes_accessed = (batch * k_pad * x_bytes + resident_bytes
                      + batch * n_pad * out_bytes)

    out = pl.pallas_call(
        simplenn_kernel,
        out_shape=jax.ShapeDtypeStruct((batch, n_pad), out_dtype),
        grid_spec=pltpu.PrefetchScalarGridSpec(
            num_scalar_prefetch=0,
            grid=grid,
            in_specs=[
                pl.BlockSpec((tile_m, k_pad), lambda i: (i, 0)),   # streamed x tile
                resident(w1t), resident(b1r),                      # weights stay in VMEM
                resident(w2t), resident(b2r),
            ],
            out_specs=pl.BlockSpec((tile_m, n_pad), lambda i: (i, 0)),
        ),
        compiler_params=pltpu.CompilerParams(
            dimension_semantics=("parallel",),   # shard batch tiles across TCs (v7x)
            vmem_limit_bytes=vmem_limit,
        ),
        cost_estimate=pl.CostEstimate(flops=flops, transcendentals=0,
                                      bytes_accessed=bytes_accessed),
    )(xp, w1t, b1r, w2t, b2r)

    return out[:, :out_dim]


def simplenn_forward(x, prepared_params, dims):
    w1t, b1r, w2t, b2r = prepared_params
    kwargs = dict(in_dim=dims["in_dim"], out_dim=dims["out_dim"],
                  k_pad=dims["k_pad"], h_pad=dims["h_pad"], n_pad=dims["n_pad"])
    try:
        return _forward_impl(x, w1t, b1r, w2t, b2r,
                             single_buffer_weights=True, **kwargs)
    except NotImplementedError:
        raise
    except Exception:
        # Defensive fallback: if this backend rejects pl.Buffered(1) for the resident
        # operands, re-trace with default double buffering (identical math, more VMEM).
        return _forward_impl(x, w1t, b1r, w2t, b2r,
                             single_buffer_weights=False, **kwargs)


# ------------------------- reference & param construction -------------------------

def make_params(key, input_size, output_size, bias=True):
    """Matches SimpleNN: i2h = Linear(input, input//2), h2o = Linear(input//2, output)."""
    hidden = input_size // 2
    params = []
    for din, dout in ((input_size, hidden), (hidden, output_size)):
        key, kw, kb = jax.random.split(key, 3)
        bound = (1.0 / din) ** 0.5  # torch.nn.Linear default init range
        w = jax.random.uniform(kw, (dout, din), jnp.float32, -bound, bound)
        b = (jax.random.uniform(kb, (dout,), jnp.float32, -bound, bound)
             if bias else jnp.zeros((dout,), jnp.float32))
        params.append((w, b))
    return params


def simplenn_ref(x, params):
    (w1, b1), (w2, b2) = params
    h = jnp.maximum(x @ w1.T + b1, 0.0)
    return h @ w2.T + b2


if __name__ == "__main__":
    key = jax.random.PRNGKey(0)
    kx, kp = jax.random.split(key)

    batch, input_size, output_size = 8, 16, 8
    x = jax.random.normal(kx, (batch, input_size), dtype=jnp.float32)
    params = make_params(kp, input_size, output_size, bias=True)

    # One-time layout prep (transpose + lane padding + bf16 cast), hoisted out of the
    # forward path.  f32 accumulation stays inside the kernel.
    prepared, dims = prepare_params(params, compute_dtype=jnp.bfloat16)

    out = simplenn_forward(x, prepared, dims)
    jax.block_until_ready(out)

    ref = simplenn_ref(x, params)                     # f32 reference
    assert out.shape == (batch, output_size)
    # bf16 operands with f32 accumulation -> mixed-precision tolerance vs the f32 ref.
    assert jnp.allclose(out, ref, atol=5e-2, rtol=5e-2), float(jnp.max(jnp.abs(out - ref)))
    print("KERNEL_OK")
</pallas_src>

<mosaic_0001>
module attributes {stable_mosaic.version = 11 : i64} {
  func.func @simplenn_kernel(%arg0: i32, %arg1: memref<8x128xbf16, #tpu.memory_space<vmem>>, %arg2: memref<128x128xbf16, #tpu.memory_space<vmem>>, %arg3: memref<1x128xf32, #tpu.memory_space<vmem>>, %arg4: memref<128x128xbf16, #tpu.memory_space<vmem>>, %arg5: memref<1x128xf32, #tpu.memory_space<vmem>>, %arg6: memref<8x128xf32, #tpu.memory_space<vmem>>) attributes {dimension_semantics = [#tpu.dimension_semantics<parallel>], iteration_bounds = array<i64: 1>, scalar_prefetch = 0 : i64, scratch_operands = 0 : i64, tpu.core_type = #tpu.core_type<tc>, window_params = [{transform_indices = @transform_0, window_bounds = array<i64: 8, 128>}, {pipeline_mode = #tpu.pipeline_mode<synchronous>, transform_indices = @transform_1, window_bounds = array<i64: 128, 128>}, {pipeline_mode = #tpu.pipeline_mode<synchronous>, transform_indices = @transform_2, window_bounds = array<i64: 1, 128>}, {pipeline_mode = #tpu.pipeline_mode<synchronous>, transform_indices = @transform_3, window_bounds = array<i64: 128, 128>}, {pipeline_mode = #tpu.pipeline_mode<synchronous>, transform_indices = @transform_4, window_bounds = array<i64: 1, 128>}, {transform_indices = @transform_5, window_bounds = array<i64: 8, 128>}]} {
    %c0 = arith.constant 0 : index
    %c0_0 = arith.constant 0 : index
    %0 = vector.load %arg1[%c0, %c0_0] : memref<8x128xbf16, #tpu.memory_space<vmem>>, vector<8x128xbf16>
    %c0_1 = arith.constant 0 : index
    %c0_2 = arith.constant 0 : index
    %1 = vector.load %arg2[%c0_1, %c0_2] : memref<128x128xbf16, #tpu.memory_space<vmem>>, vector<128x128xbf16>
    %cst = arith.constant dense<0.000000e+00> : vector<8x128xf32>
    %2 = tpu.matmul %0, %1, %cst {dimension_numbers = #tpu.dot_dimension_numbers<[1], [0], [0], [1], [0, 0, 1, 1], [], []>} : vector<8x128xbf16>, vector<128x128xbf16>, vector<8x128xf32> -> vector<8x128xf32>
    %c0_3 = arith.constant 0 : index
    %c0_4 = arith.constant 0 : index
    %3 = vector.load %arg3[%c0_3, %c0_4] : memref<1x128xf32, #tpu.memory_space<vmem>>, vector<1x128xf32>
    %4 = vector.broadcast %3 : vector<1x128xf32> to vector<8x128xf32>
    %5 = arith.addf %2, %4 : vector<8x128xf32>
    %cst_5 = arith.constant 0.000000e+00 : f32
    %6 = vector.broadcast %cst_5 : f32 to vector<8x128xf32>
    %7 = arith.maximumf %5, %6 : vector<8x128xf32>
    %8 = arith.truncf %7 : vector<8x128xf32> to vector<8x128xbf16>
    %c0_6 = arith.constant 0 : index
    %c0_7 = arith.constant 0 : index
    %9 = vector.load %arg4[%c0_6, %c0_7] : memref<128x128xbf16, #tpu.memory_space<vmem>>, vector<128x128xbf16>
    %cst_8 = arith.constant dense<0.000000e+00> : vector<8x128xf32>
    %10 = tpu.matmul %8, %9, %cst_8 {dimension_numbers = #tpu.dot_dimension_numbers<[1], [0], [0], [1], [0, 0, 1, 1], [], []>} : vector<8x128xbf16>, vector<128x128xbf16>, vector<8x128xf32> -> vector<8x128xf32>
    %c0_9 = arith.constant 0 : index
    %c0_10 = arith.constant 0 : index
    %11 = vector.load %arg5[%c0_9, %c0_10] : memref<1x128xf32, #tpu.memory_space<vmem>>, vector<1x128xf32>
    %12 = vector.broadcast %11 : vector<1x128xf32> to vector<8x128xf32>
    %13 = arith.addf %10, %12 : vector<8x128xf32>
    %c0_11 = arith.constant 0 : index
    %c0_12 = arith.constant 0 : index
    %14 = vector.load %arg6[%c0_11, %c0_12] : memref<8x128xf32, #tpu.memory_space<vmem>>, vector<8x128xf32>
    tpu.vector_store %arg6[%c0_11, %c0_12], %13 {strides = array<i32>} : memref<8x128xf32, #tpu.memory_space<vmem>>, vector<8x128xf32>,
    return
  }
  func.func @transform_0(%arg0: i32) -> (i32, i32) {
    %c0_i32 = arith.constant 0 : i32
    %c0_i32_0 = arith.constant 0 : i32
    return %arg0, %c0_i32 : i32, i32
  }
  func.func @transform_1(%arg0: i32) -> (i32, i32) {
    %c0_i32 = arith.constant 0 : i32
    %c0_i32_0 = arith.constant 0 : i32
    %c0_i32_1 = arith.constant 0 : i32
    return %c0_i32, %c0_i32_0 : i32, i32
  }
  func.func @transform_2(%arg0: i32) -> (i32, i32) {
    %c0_i32 = arith.constant 0 : i32
    %c0_i32_0 = arith.constant 0 : i32
    %c0_i32_1 = arith.constant 0 : i32
    return %c0_i32, %c0_i32_0 : i32, i32
  }
  func.func @transform_3(%arg0: i32) -> (i32, i32) {
    %c0_i32 = arith.constant 0 : i32
    %c0_i32_0 = arith.constant 0 : i32
    %c0_i32_1 = arith.constant 0 : i32
    return %c0_i32, %c0_i32_0 : i32, i32
  }
  func.func @transform_4(%arg0: i32) -> (i32, i32) {
    %c0_i32 = arith.constant 0 : i32
    %c0_i32_0 = arith.constant 0 : i32
    %c0_i32_1 = arith.constant 0 : i32
    return %c0_i32, %c0_i32_0 : i32, i32
  }
  func.func @transform_5(%arg0: i32) -> (i32, i32) {
    %c0_i32 = arith.constant 0 : i32
    %c0_i32_0 = arith.constant 0 : i32
    return %arg0, %c0_i32 : i32, i32
  }
}

module attributes {stable_mosaic.version = 11 : i64} {
  func.func @simplenn_kernel(%arg0: i32, %arg1: memref<8x128xbf16, #tpu.memory_space<vmem>>, %arg2: memref<128x128xbf16, #tpu.memory_space<vmem>>, %arg3: memref<1x128xf32, #tpu.memory_space<vmem>>, %arg4: memref<128x128xbf16, #tpu.memory_space<vmem>>, %arg5: memref<1x128xf32, #tpu.memory_space<vmem>>, %arg6: memref<8x128xf32, #tpu.memory_space<vmem>>) attributes {dimension_semantics = [#tpu.dimension_semantics<parallel>], iteration_bounds = array<i64: 1>, scalar_prefetch = 0 : i64, scratch_operands = 0 : i64, tpu.core_type = #tpu.core_type<tc>, window_params = [{transform_indices = @transform_0, window_bounds = array<i64: 8, 128>}, {pipeline_mode = #tpu.pipeline_mode<synchronous>, transform_indices = @transform_1, window_bounds = array<i64: 128, 128>}, {pipeline_mode = #tpu.pipeline_mode<synchronous>, transform_indices = @transform_2, window_bounds = array<i64: 1, 128>}, {pipeline_mode = #tpu.pipeline_mode<synchronous>, transform_indices = @transform_3, window_bounds = array<i64: 128, 128>}, {pipeline_mode = #tpu.pipeline_mode<synchronous>, transform_indices = @transform_4, window_bounds = array<i64: 1, 128>}, {transform_indices = @transform_5, window_bounds = array<i64: 8, 128>}]} {
    %c0 = arith.constant 0 : index
    %c0_0 = arith.constant 0 : index
    %0 = vector.load %arg1[%c0, %c0_0] : memref<8x128xbf16, #tpu.memory_space<vmem>>, vector<8x128xbf16>
    %c0_1 = arith.constant 0 : index
    %c0_2 = arith.constant 0 : index
    %1 = vector.load %arg2[%c0_1, %c0_2] : memref<128x128xbf16, #tpu.memory_space<vmem>>, vector<128x128xbf16>
    %cst = arith.constant dense<0.000000e+00> : vector<8x128xf32>
    %2 = tpu.matmul %0, %1, %cst {dimension_numbers = #tpu.dot_dimension_numbers<[1], [0], [0], [1], [0, 0, 1, 1], [], []>} : vector<8x128xbf16>, vector<128x128xbf16>, vector<8x128xf32> -> vector<8x128xf32>
    %c0_3 = arith.constant 0 : index
    %c0_4 = arith.constant 0 : index
    %3 = vector.load %arg3[%c0_3, %c0_4] : memref<1x128xf32, #tpu.memory_space<vmem>>, vector<1x128xf32>
    %4 = vector.broadcast %3 : vector<1x128xf32> to vector<8x128xf32>
    %5 = arith.addf %2, %4 : vector<8x128xf32>
    %cst_5 = arith.constant 0.000000e+00 : f32
    %6 = vector.broadcast %cst_5 : f32 to vector<8x128xf32>
    %7 = arith.maximumf %5, %6 : vector<8x128xf32>
    %8 = arith.truncf %7 : vector<8x128xf32> to vector<8x128xbf16>
    %c0_6 = arith.constant 0 : index
    %c0_7 = arith.constant 0 : index
    %9 = vector.load %arg4[%c0_6, %c0_7] : memref<128x128xbf16, #tpu.memory_space<vmem>>, vector<128x128xbf16>
    %cst_8 = arith.constant dense<0.000000e+00> : vector<8x128xf32>
    %10 = tpu.matmul %8, %9, %cst_8 {dimension_numbers = #tpu.dot_dimension_numbers<[1], [0], [0], [1], [0, 0, 1, 1], [], []>} : vector<8x128xbf16>, vector<128x128xbf16>, vector<8x128xf32> -> vector<8x128xf32>
    %c0_9 = arith.constant 0 : index
    %c0_10 = arith.constant 0 : index
    %11 = vector.load %arg5[%c0_9, %c0_10] : memref<1x128xf32, #tpu.memory_space<vmem>>, vector<1x128xf32>
    %12 = vector.broadcast %11 : vector<1x128xf32> to vector<8x128xf32>
    %13 = arith.addf %10, %12 : vector<8x128xf32>
    %c0_11 = arith.constant 0 : index
    %c0_12 = arith.constant 0 : index
    %14 = vector.load %arg6[%c0_11, %c0_12] : memref<8x128xf32, #tpu.memory_space<vmem>>, vector<8x128xf32>
    tpu.vector_store %arg6[%c0_11, %c0_12], %13 {strides = array<i32>} : memref<8x128xf32, #tpu.memory_space<vmem>>, vector<8x128xf32>,
    return
  }
  func.func @transform_0(%arg0: i32) -> (i32, i32) {
    %c0_i32 = arith.constant 0 : i32
    %c0_i32_0 = arith.constant 0 : i32
    return %arg0, %c0_i32 : i32, i32
  }
  func.func @transform_1(%arg0: i32) -> (i32, i32) {
    %c0_i32 = arith.constant 0 : i32
    %c0_i32_0 = arith.constant 0 : i32
    %c0_i32_1 = arith.constant 0 : i32
    return %c0_i32, %c0_i32_0 : i32, i32
  }
  func.func @transform_2(%arg0: i32) -> (i32, i32) {
    %c0_i32 = arith.constant 0 : i32
    %c0_i32_0 = arith.constant 0 : i32
    %c0_i32_1 = arith.constant 0 : i32
    return %c0_i32, %c0_i32_0 : i32, i32
  }
  func.func @transform_3(%arg0: i32) -> (i32, i32) {
    %c0_i32 = arith.constant 0 : i32
    %c0_i32_0 = arith.constant 0 : i32
    %c0_i32_1 = arith.constant 0 : i32
    return %c0_i32, %c0_i32_0 : i32, i32
  }
  func.func @transform_4(%arg0: i32) -> (i32, i32) {
    %c0_i32 = arith.constant 0 : i32
    %c0_i32_0 = arith.constant 0 : i32
    %c0_i32_1 = arith.constant 0 : i32
    return %c0_i32, %c0_i32_0 : i32, i32
  }
  func.func @transform_5(%arg0: i32) -> (i32, i32) {
    %c0_i32 = arith.constant 0 : i32
    %c0_i32_0 = arith.constant 0 : i32
    return %arg0, %c0_i32 : i32, i32
  }
}

</mosaic_0001>

<llo_original>
// kernel: _forward_impl.1
$region0: #{_forward_impl.1}
  #allocation0 [shape = 'u32[]', space=smem, size = 0x4, offset = 0x4, fixed_abs, tag = 'smem constant byte address 0x4 - core index']
  #allocation1 [shape = 'u32[144,128]{1,0:T(1,128)}', space=vmem, size = 0x12000, scoped, tag = 'internal scratch']
  %s0 = inlined_call_operand.vmem [shape: bf16[8,128], index: 0, kind: input, shape index: {}]
  %s1 = inlined_call_operand.hbm [shape: bf16[128,128], index: 1, kind: input, shape index: {}]
  %s2 = inlined_call_operand.vmem [shape: f32[1,128], index: 2, kind: input, shape index: {}]
  %s3 = inlined_call_operand.hbm [shape: bf16[128,128], index: 3, kind: input, shape index: {}]
  %s4 = inlined_call_operand.vmem [shape: f32[1,128], index: 4, kind: input, shape index: {}]
  %s5 = inlined_call_operand.hbm [shape: f32[8,128], index: 5, kind: output, shape index: {}]
  %s6 = sld [smem:[#allocation0]]
  $region38: #{_forward_impl.1} parent=0
    _
  %s8 = ssub.s32 1, %s6
  %s9 = scalar_select 0, %s8, %s6
  $region1: #{_forward_impl.1} parent=0
    #allocation2 [shape = 'u8[32768]{0}', space=vmem, size = 0x8000, scoped, tag = 'input window, operand 1, single buffered']
    #allocation3 [shape = 's32[1]{0}', space=sflag, size = 0x4, scoped, tag = 'scoped memory for _forward_impl.1']
    #allocation4 [shape = 's32[1]{0}', space=sflag, size = 0x4, scoped, tag = 'scoped memory for _forward_impl.1']
    #allocation5 [shape = 'u8[32768]{0}', space=vmem, size = 0x8000, scoped, tag = 'input window, operand 3, single buffered']
    #allocation6 [shape = 's32[1]{0}', space=sflag, size = 0x4, scoped, tag = 'scoped memory for _forward_impl.1']
    #allocation7 [shape = 'u8[4096]{0}', space=vmem, size = 0x1000, scoped, tag = 'output window, operand 0, single buffered']
    %10 = vsyncpa [#allocation3], 0
    %11 = vsyncpa [#allocation6], 0
    %12 = vsyncpa [#allocation4], 0
    // Predicated region
    $region2: #{_forward_impl.1} parent=1 // pred_check
      _
    $region3: #{_forward_impl.1} parent=1 // pred_check_branch
      %14 = sbr.rel (0) target = $region5
    $region4: #{_forward_impl.1} parent=1 // pred_region
      _
    $region5: #{_forward_impl.1} parent=1 // pred_fallthru
      _
    // Predicated region
    $region6: #{_forward_impl.1} parent=1 // pred_check
      _
    $region7: #{_forward_impl.1} parent=1 // pred_check_branch
      %16 = sbr.rel (0) target = $region9
    $region8: #{_forward_impl.1} parent=1 // pred_region
      %s18 = ssub.s32 1024, 1024
      %19 = vsyncadd [#allocation3], %s18
      %s20 = sshll.u32 [#allocation2], 4
      %s21 = int_to_ptr.vmem [resolvable:$true] %s20
      %26 = dma.hbm_to_vmem [thread:$0]  %s1, 1024, %s21, [#allocation3], 64, 64, 4
    $region9: #{_forward_impl.1} parent=1 // pred_fallthru
      _
    // Predicated region
    $region10: #{_forward_impl.1} parent=1 // pred_check
      _
    $region11: #{_forward_impl.1} parent=1 // pred_check_branch
      %28 = sbr.rel (0) target = $region13
    $region12: #{_forward_impl.1} parent=1 // pred_region
      _
    $region13: #{_forward_impl.1} parent=1 // pred_fallthru
      _
    // Predicated region
    $region14: #{_forward_impl.1} parent=1 // pred_check
      _
    $region15: #{_forward_impl.1} parent=1 // pred_check_branch
      %30 = sbr.rel (0) target = $region17
    $region16: #{_forward_impl.1} parent=1 // pred_region
      %s32 = ssub.s32 1024, 1024
      %33 = vsyncadd [#allocation6], %s32
      %s34 = sshll.u32 [#allocation5], 4
      %s35 = int_to_ptr.vmem [resolvable:$true] %s34
      %40 = dma.hbm_to_vmem [thread:$0]  %s3, 1024, %s35, [#allocation6], 64, 64, 4
    $region17: #{_forward_impl.1} parent=1 // pred_fallthru
      _
    // Predicated region
    $region18: #{_forward_impl.1} parent=1 // pred_check
      _
    $region19: #{_forward_impl.1} parent=1 // pred_check_branch
      %42 = sbr.rel (0) target = $region21
    $region20: #{_forward_impl.1} parent=1 // pred_region
      _
    $region21: #{_forward_impl.1} parent=1 // pred_fallthru
      _
    // Predicated region
    $region22: #{_forward_impl.1} parent=1 // pred_check
      _
    $region23: #{_forward_impl.1} parent=1 // pred_check_branch
      %44 = sbr.rel (0) target = $region25
    $region24: #{_forward_impl.1} parent=1 // pred_region
      %45 = dma.done [#allocation3], 1024
    $region25: #{_forward_impl.1} parent=1 // pred_fallthru
      _
    // Predicated region
    $region26: #{_forward_impl.1} parent=1 // pred_check
      _
    $region27: #{_forward_impl.1} parent=1 // pred_check_branch
      %47 = sbr.rel (0) target = $region29
    $region28: #{_forward_impl.1} parent=1 // pred_region
      %48 = dma.done [#allocation6], 1024
    $region29: #{_forward_impl.1} parent=1 // pred_fallthru
      _
    %v50 = vld [vmem:[%s0] sm:$0xf]
    %v51 = vld [vmem:[#allocation2] sm:$0xf]
    %v52 = vld [vmem:[#allocation2 + $0x4] sm:$0xf]
    %v53 = vld [vmem:[#allocation2 + $0x8] sm:$0xf]
    %v54 = vld [vmem:[#allocation2 + $0xc] sm:$0xf]
    %v55 = vld [vmem:[#allocation2 + $0x10] sm:$0xf]
    %v56 = vld [vmem:[#allocation2 + $0x14] sm:$0xf]
    %v57 = vld [vmem:[#allocation2 + $0x18] sm:$0xf]
    %v58 = vld [vmem:[#allocation2 + $0x1c] sm:$0xf]
    %v59 = vld [vmem:[#allocation2 + $0x20] sm:$0xf]
    %v60 = vld [vmem:[#allocation2 + $0x24] sm:$0xf]
    %v61 = vld [vmem:[#allocation2 + $0x28] sm:$0xf]
    %v62 = vld [vmem:[#allocation2 + $0x2c] sm:$0xf]
    %v63 = vld [vmem:[#allocation2 + $0x30] sm:$0xf]
    %v64 = vld [vmem:[#allocation2 + $0x34] sm:$0xf]
    %v65 = vld [vmem:[#allocation2 + $0x38] sm:$0xf]
    %v66 = vld [vmem:[#allocation2 + $0x3c] sm:$0xf]
    %v67 = vld [vmem:[%s2] sm:$0x1]
    %v69 = vlaneseq
    %v70 = vshrl.u32 %v69, 7
    %v71 = vsub.s32 0, %v70
    %v72 = vrot.slane %v67, %v71
    %v90 = vunpack.c.l.b16 %v51
    %v91 = vunpack.c.l.b16 %v52
    %v92 = vunpack.c.l.b16 %v53
    %v93 = vunpack.c.l.b16 %v54
    %v94 = vunpack.c.l.b16 %v55
    %v95 = vunpack.c.l.b16 %v56
    %v96 = vunpack.c.l.b16 %v57
    %v97 = vunpack.c.l.b16 %v58
    %v98 = vunpack.c.l.b16 %v59
    %v99 = vunpack.c.l.b16 %v60
    %v100 = vunpack.c.l.b16 %v61
    %v101 = vunpack.c.l.b16 %v62
    %v102 = vunpack.c.l.b16 %v63
    %v103 = vunpack.c.l.b16 %v64
    %v104 = vunpack.c.l.b16 %v65
    %v105 = vunpack.c.l.b16 %v66
    %v106 = vpack.c.b16 %v91, %v90
    %v107 = vpack.c.b16 %v93, %v92
    %v108 = vpack.c.b16 %v95, %v94
    %v109 = vpack.c.b16 %v97, %v96
    %v110 = vpack.c.b16 %v99, %v98
    %v111 = vpack.c.b16 %v101, %v100
    %v112 = vpack.c.b16 %v103, %v102
    %v113 = vpack.c.b16 %v105, %v104
    %122 = vmatprep.subr.bf16.mxu0 0
    %123 = vmatpush1.bf16.msra.mxu0 %v113
    %124 = vmatprep.subr.bf16.mxu0 0
    %125 = vmatpush1.bf16.msra.mxu0 %v112
    %126 = vmatprep.subr.bf16.mxu0 0
    %127 = vmatpush1.bf16.msra.mxu0 %v111
    %128 = vmatprep.subr.bf16.mxu0 0
    %129 = vmatpush1.bf16.msra.mxu0 %v110
    %130 = vmatprep.subr.bf16.mxu0 0
    %131 = vmatpush1.bf16.msra.mxu0 %v109
    %132 = vmatprep.subr.bf16.mxu0 0
    %133 = vmatpush1.bf16.msra.mxu0 %v108
    %134 = vmatprep.subr.bf16.mxu0 0
    %135 = vmatpush1.bf16.msra.mxu0 %v107
    %136 = vmatprep.subr.bf16.mxu0 0
    %137 = vmatpush1.bf16.msra.mxu0 %v106
    %138 = vmatprep.subr.bf16.mxu0 0
    %139 = vmatpush2.bf16.msra.mxu0 0
    %140 = vmatprep.subr.bf16.mxu0 0
    %141 = vmatpush2.bf16.msra.mxu0 0
    %142 = vmatprep.subr.bf16.mxu0 0
    %143 = vmatpush2.bf16.msra.mxu0 0
    %144 = vmatprep.subr.bf16.mxu0 0
    %145 = vmatpush2.bf16.msra.mxu0 0
    %146 = vmatprep.subr.bf16.mxu0 0
    %147 = vmatpush2.bf16.msra.mxu0 0
    %148 = vmatprep.subr.bf16.mxu0 0
    %149 = vmatpush2.bf16.msra.mxu0 0
    %150 = vmatprep.subr.bf16.mxu0 0
    %151 = vmatpush2.bf16.msra.mxu0 0
    %152 = vmatprep.subr.bf16.mxu0 0
    %153 = vmatpush2.bf16.msra.mxu0 0
    %154 = vmatprep.mubr.bf16.mxu0 0
    %155 = vmatmul.mubr.bf16.gmra.mxu0 %v50
    %v156 = vpop.f32.mrf.mxu0
    %v157 = vadd.f32 %v72, %v156
    %v158 = vpop.f32.mrf.mxu0
    %v159 = vpop.f32.mrf.mxu0
    %v160 = vpop.f32.mrf.mxu0
    %161 = vdwg.mxu0
    %v162 = vmax.f32 %v157, 0.0
    %v163 = vpack.c.bf16 %v162, %v162
    %v164 = vld [vmem:[#allocation5] sm:$0xf]
    %v165 = vld [vmem:[#allocation5 + $0x4] sm:$0xf]
    %v166 = vld [vmem:[#allocation5 + $0x8] sm:$0xf]
    %v167 = vld [vmem:[#allocation5 + $0xc] sm:$0xf]
    %v168 = vld [vmem:[#allocation5 + $0x10] sm:$0xf]
    %v169 = vld [vmem:[#allocation5 + $0x14] sm:$0xf]
    %v170 = vld [vmem:[#allocation5 + $0x18] sm:$0xf]
    %v171 = vld [vmem:[#allocation5 + $0x1c] sm:$0xf]
    %v172 = vld [vmem:[#allocation5 + $0x20] sm:$0xf]
    %v173 = vld [vmem:[#allocation5 + $0x24] sm:$0xf]
    %v174 = vld [vmem:[#allocation5 + $0x28] sm:$0xf]
    %v175 = vld [vmem:[#allocation5 + $0x2c] sm:$0xf]
    %v176 = vld [vmem:[#allocation5 + $0x30] sm:$0xf]
    %v177 = vld [vmem:[#allocation5 + $0x34] sm:$0xf]
    %v178 = vld [vmem:[#allocation5 + $0x38] sm:$0xf]
    %v179 = vld [vmem:[#allocation5 + $0x3c] sm:$0xf]
    %v180 = vld [vmem:[%s4] sm:$0x1]
    %v182 = vlaneseq
    %v183 = vshrl.u32 %v182, 7
    %v184 = vsub.s32 0, %v183
    %v185 = vrot.slane %v180, %v184
    %v203 = vunpack.c.l.b16 %v164
    %v204 = vunpack.c.l.b16 %v165
    %v205 = vunpack.c.l.b16 %v166
    %v206 = vunpack.c.l.b16 %v167
    %v207 = vunpack.c.l.b16 %v168
    %v208 = vunpack.c.l.b16 %v169
    %v209 = vunpack.c.l.b16 %v170
    %v210 = vunpack.c.l.b16 %v171
    %v211 = vunpack.c.l.b16 %v172
    %v212 = vunpack.c.l.b16 %v173
    %v213 = vunpack.c.l.b16 %v174
    %v214 = vunpack.c.l.b16 %v175
    %v215 = vunpack.c.l.b16 %v176
    %v216 = vunpack.c.l.b16 %v177
    %v217 = vunpack.c.l.b16 %v178
    %v218 = vunpack.c.l.b16 %v179
    %v219 = vpack.c.b16 %v204, %v203
    %v220 = vpack.c.b16 %v206, %v205
    %v221 = vpack.c.b16 %v208, %v207
    %v222 = vpack.c.b16 %v210, %v209
    %v223 = vpack.c.b16 %v212, %v211
    %v224 = vpack.c.b16 %v214, %v213
    %v225 = vpack.c.b16 %v216, %v215
    %v226 = vpack.c.b16 %v218, %v217
    %235 = vmatprep.subr.bf16.mxu0 0
    %236 = vmatpush1.bf16.msra.mxu0 %v226
    %237 = vmatprep.subr.bf16.mxu0 0
    %238 = vmatpush1.bf16.msra.mxu0 %v225
    %239 = vmatprep.subr.bf16.mxu0 0
    %240 = vmatpush1.bf16.msra.mxu0 %v224
    %241 = vmatprep.subr.bf16.mxu0 0
    %242 = vmatpush1.bf16.msra.mxu0 %v223
    %243 = vmatprep.subr.bf16.mxu0 0
    %244 = vmatpush1.bf16.msra.mxu0 %v222
    %245 = vmatprep.subr.bf16.mxu0 0
    %246 = vmatpush1.bf16.msra.mxu0 %v221
    %247 = vmatprep.subr.bf16.mxu0 0
    %248 = vmatpush1.bf16.msra.mxu0 %v220
    %249 = vmatprep.subr.bf16.mxu0 0
    %250 = vmatpush1.bf16.msra.mxu0 %v219
    %251 = vmatprep.subr.bf16.mxu0 0
    %252 = vmatpush2.bf16.msra.mxu0 0
    %253 = vmatprep.subr.bf16.mxu0 0
    %254 = vmatpush2.bf16.msra.mxu0 0
    %255 = vmatprep.subr.bf16.mxu0 0
    %256 = vmatpush2.bf16.msra.mxu0 0
    %257 = vmatprep.subr.bf16.mxu0 0
    %258 = vmatpush2.bf16.msra.mxu0 0
    %259 = vmatprep.subr.bf16.mxu0 0
    %260 = vmatpush2.bf16.msra.mxu0 0
    %261 = vmatprep.subr.bf16.mxu0 0
    %262 = vmatpush2.bf16.msra.mxu0 0
    %263 = vmatprep.subr.bf16.mxu0 0
    %264 = vmatpush2.bf16.msra.mxu0 0
    %265 = vmatprep.subr.bf16.mxu0 0
    %266 = vmatpush2.bf16.msra.mxu0 0
    %267 = vmatprep.mubr.bf16.mxu0 0
    %268 = vmatmul.mubr.bf16.gmra.mxu0 %v163
    %v269 = vpop.f32.mrf.mxu0
    %v270 = vadd.f32 %v185, %v269
    %v271 = vpop.f32.mrf.mxu0
    %v272 = vpop.f32.mrf.mxu0
    %v273 = vpop.f32.mrf.mxu0
    %274 = vdwg.mxu0
    %275 = vst [vmem:[#allocation7] sm:$0xff] %v270
    // Predicated region
    $region30: #{_forward_impl.1} parent=1 // pred_check
      _
    $region31: #{_forward_impl.1} parent=1 // pred_check_branch
      %277 = sbr.rel (0) target = $region33
    $region32: #{_forward_impl.1} parent=1 // pred_region
      %s279 = ssub.s32 128, 128
      %280 = vsyncadd [#allocation4], %s279
      %s282 = sshll.u32 [#allocation7], 4
      %s283 = int_to_ptr.vmem [resolvable:$true] %s282
      %285 = dma.vmem_to_hbm [thread:$0]  %s283, 128, %s5, [#allocation4]
    $region33: #{_forward_impl.1} parent=1 // pred_fallthru
      _
    // Predicated region
    $region34: #{_forward_impl.1} parent=1 // pred_check
      _
    $region35: #{_forward_impl.1} parent=1 // pred_check_branch
      %287 = sbr.rel (0) target = $region37
    $region36: #{_forward_impl.1} parent=1 // pred_region
      %288 = dma.done [#allocation4], 128
    $region37: #{_forward_impl.1} parent=1 // pred_fallthru
      _
    %289 = vsyncpa [#allocation3], 1
    %290 = vsyncpa [#allocation6], 1
    %291 = vsyncpa [#allocation4], 1

// kernel: _forward_impl.1
$region0: #{_forward_impl.1}
  #allocation0 [shape = 'u32[]', space=smem, size = 0x4, offset = 0x4, fixed_abs, tag = 'smem constant byte address 0x4 - core index']
  #allocation1 [shape = 'u32[144,128]{1,0:T(1,128)}', space=vmem, size = 0x12000, scoped, tag = 'internal scratch']
  %s0 = inlined_call_operand.vmem [shape: bf16[8,128], index: 0, kind: input, shape index: {}]
  %s1 = inlined_call_operand.hbm [shape: bf16[128,128], index: 1, kind: input, shape index: {}]
  %s2 = inlined_call_operand.vmem [shape: f32[1,128], index: 2, kind: input, shape index: {}]
  %s3 = inlined_call_operand.hbm [shape: bf16[128,128], index: 3, kind: input, shape index: {}]
  %s4 = inlined_call_operand.vmem [shape: f32[1,128], index: 4, kind: input, shape index: {}]
  %s5 = inlined_call_operand.hbm [shape: f32[8,128], index: 5, kind: output, shape index: {}]
  %s6 = sld [smem:[#allocation0]]
  $region38: #{_forward_impl.1} parent=0
    _
  %s8 = ssub.s32 1, %s6
  %s9 = scalar_select 0, %s8, %s6
  $region1: #{_forward_impl.1} parent=0
    #allocation2 [shape = 'u8[32768]{0}', space=vmem, size = 0x8000, scoped, tag = 'input window, operand 1, single buffered']
    #allocation3 [shape = 's32[1]{0}', space=sflag, size = 0x4, scoped, tag = 'scoped memory for _forward_impl.1']
    #allocation4 [shape = 's32[1]{0}', space=sflag, size = 0x4, scoped, tag = 'scoped memory for _forward_impl.1']
    #allocation5 [shape = 'u8[32768]{0}', space=vmem, size = 0x8000, scoped, tag = 'input window, operand 3, single buffered']
    #allocation6 [shape = 's32[1]{0}', space=sflag, size = 0x4, scoped, tag = 'scoped memory for _forward_impl.1']
    #allocation7 [shape = 'u8[4096]{0}', space=vmem, size = 0x1000, scoped, tag = 'output window, operand 0, single buffered']
    %10 = vsyncpa [#allocation3], 0
    %11 = vsyncpa [#allocation6], 0
    %12 = vsyncpa [#allocation4], 0
    // Predicated region
    $region2: #{_forward_impl.1} parent=1 // pred_check
      _
    $region3: #{_forward_impl.1} parent=1 // pred_check_branch
      %14 = sbr.rel (0) target = $region5
    $region4: #{_forward_impl.1} parent=1 // pred_region
      _
    $region5: #{_forward_impl.1} parent=1 // pred_fallthru
      _
    // Predicated region
    $region6: #{_forward_impl.1} parent=1 // pred_check
      _
    $region7: #{_forward_impl.1} parent=1 // pred_check_branch
      %16 = sbr.rel (0) target = $region9
    $region8: #{_forward_impl.1} parent=1 // pred_region
      %s18 = ssub.s32 1024, 1024
      %19 = vsyncadd [#allocation3], %s18
      %s20 = sshll.u32 [#allocation2], 4
      %s21 = int_to_ptr.vmem [resolvable:$true] %s20
      %26 = dma.hbm_to_vmem [thread:$0]  %s1, 1024, %s21, [#allocation3], 64, 64, 4
    $region9: #{_forward_impl.1} parent=1 // pred_fallthru
      _
    // Predicated region
    $region10: #{_forward_impl.1} parent=1 // pred_check
      _
    $region11: #{_forward_impl.1} parent=1 // pred_check_branch
      %28 = sbr.rel (0) target = $region13
    $region12: #{_forward_impl.1} parent=1 // pred_region
      _
    $region13: #{_forward_impl.1} parent=1 // pred_fallthru
      _
    // Predicated region
    $region14: #{_forward_impl.1} parent=1 // pred_check
      _
    $region15: #{_forward_impl.1} parent=1 // pred_check_branch
      %30 = sbr.rel (0) target = $region17
    $region16: #{_forward_impl.1} parent=1 // pred_region
      %s32 = ssub.s32 1024, 1024
      %33 = vsyncadd [#allocation6], %s32
      %s34 = sshll.u32 [#allocation5], 4
      %s35 = int_to_ptr.vmem [resolvable:$true] %s34
      %40 = dma.hbm_to_vmem [thread:$0]  %s3, 1024, %s35, [#allocation6], 64, 64, 4
    $region17: #{_forward_impl.1} parent=1 // pred_fallthru
      _
    // Predicated region
    $region18: #{_forward_impl.1} parent=1 // pred_check
      _
    $region19: #{_forward_impl.1} parent=1 // pred_check_branch
      %42 = sbr.rel (0) target = $region21
    $region20: #{_forward_impl.1} parent=1 // pred_region
      _
    $region21: #{_forward_impl.1} parent=1 // pred_fallthru
      _
    // Predicated region
    $region22: #{_forward_impl.1} parent=1 // pred_check
      _
    $region23: #{_forward_impl.1} parent=1 // pred_check_branch
      %44 = sbr.rel (0) target = $region25
    $region24: #{_forward_impl.1} parent=1 // pred_region
      %45 = dma.done [#allocation3], 1024
    $region25: #{_forward_impl.1} parent=1 // pred_fallthru
      _
    // Predicated region
    $region26: #{_forward_impl.1} parent=1 // pred_check
      _
    $region27: #{_forward_impl.1} parent=1 // pred_check_branch
      %47 = sbr.rel (0) target = $region29
    $region28: #{_forward_impl.1} parent=1 // pred_region
      %48 = dma.done [#allocation6], 1024
    $region29: #{_forward_impl.1} parent=1 // pred_fallthru
      _
    %v50 = vld [vmem:[%s0] sm:$0xf]
    %v51 = vld [vmem:[#allocation2] sm:$0xf]
    %v52 = vld [vmem:[#allocation2 + $0x4] sm:$0xf]
    %v53 = vld [vmem:[#allocation2 + $0x8] sm:$0xf]
    %v54 = vld [vmem:[#allocation2 + $0xc] sm:$0xf]
    %v55 = vld [vmem:[#allocation2 + $0x10] sm:$0xf]
    %v56 = vld [vmem:[#allocation2 + $0x14] sm:$0xf]
    %v57 = vld [vmem:[#allocation2 + $0x18] sm:$0xf]
    %v58 = vld [vmem:[#allocation2 + $0x1c] sm:$0xf]
    %v59 = vld [vmem:[#allocation2 + $0x20] sm:$0xf]
    %v60 = vld [vmem:[#allocation2 + $0x24] sm:$0xf]
    %v61 = vld [vmem:[#allocation2 + $0x28] sm:$0xf]
    %v62 = vld [vmem:[#allocation2 + $0x2c] sm:$0xf]
    %v63 = vld [vmem:[#allocation2 + $0x30] sm:$0xf]
    %v64 = vld [vmem:[#allocation2 + $0x34] sm:$0xf]
    %v65 = vld [vmem:[#allocation2 + $0x38] sm:$0xf]
    %v66 = vld [vmem:[#allocation2 + $0x3c] sm:$0xf]
    %v67 = vld [vmem:[%s2] sm:$0x1]
    %v69 = vlaneseq
    %v70 = vshrl.u32 %v69, 7
    %v71 = vsub.s32 0, %v70
    %v72 = vrot.slane %v67, %v71
    %v90 = vunpack.c.l.b16 %v51
    %v91 = vunpack.c.l.b16 %v52
    %v92 = vunpack.c.l.b16 %v53
    %v93 = vunpack.c.l.b16 %v54
    %v94 = vunpack.c.l.b16 %v55
    %v95 = vunpack.c.l.b16 %v56
    %v96 = vunpack.c.l.b16 %v57
    %v97 = vunpack.c.l.b16 %v58
    %v98 = vunpack.c.l.b16 %v59
    %v99 = vunpack.c.l.b16 %v60
    %v100 = vunpack.c.l.b16 %v61
    %v101 = vunpack.c.l.b16 %v62
    %v102 = vunpack.c.l.b16 %v63
    %v103 = vunpack.c.l.b16 %v64
    %v104 = vunpack.c.l.b16 %v65
    %v105 = vunpack.c.l.b16 %v66
    %v106 = vpack.c.b16 %v91, %v90
    %v107 = vpack.c.b16 %v93, %v92
    %v108 = vpack.c.b16 %v95, %v94
    %v109 = vpack.c.b16 %v97, %v96
    %v110 = vpack.c.b16 %v99, %v98
    %v111 = vpack.c.b16 %v101, %v100
    %v112 = vpack.c.b16 %v103, %v102
    %v113 = vpack.c.b16 %v105, %v104
    %122 = vmatprep.subr.bf16.mxu0 0
    %123 = vmatpush1.bf16.msra.mxu0 %v113
    %124 = vmatprep.subr.bf16.mxu0 0
    %125 = vmatpush1.bf16.msra.mxu0 %v112
    %126 = vmatprep.subr.bf16.mxu0 0
    %127 = vmatpush1.bf16.msra.mxu0 %v111
    %128 = vmatprep.subr.bf16.mxu0 0
    %129 = vmatpush1.bf16.msra.mxu0 %v110
    %130 = vmatprep.subr.bf16.mxu0 0
    %131 = vmatpush1.bf16.msra.mxu0 %v109
    %132 = vmatprep.subr.bf16.mxu0 0
    %133 = vmatpush1.bf16.msra.mxu0 %v108
    %134 = vmatprep.subr.bf16.mxu0 0
    %135 = vmatpush1.bf16.msra.mxu0 %v107
    %136 = vmatprep.subr.bf16.mxu0 0
    %137 = vmatpush1.bf16.msra.mxu0 %v106
    %138 = vmatprep.subr.bf16.mxu0 0
    %139 = vmatpush2.bf16.msra.mxu0 0
    %140 = vmatprep.subr.bf16.mxu0 0
    %141 = vmatpush2.bf16.msra.mxu0 0
    %142 = vmatprep.subr.bf16.mxu0 0
    %143 = vmatpush2.bf16.msra.mxu0 0
    %144 = vmatprep.subr.bf16.mxu0 0
    %145 = vmatpush2.bf16.msra.mxu0 0
    %146 = vmatprep.subr.bf16.mxu0 0
    %147 = vmatpush2.bf16.msra.mxu0 0
    %148 = vmatprep.subr.bf16.mxu0 0
    %149 = vmatpush2.bf16.msra.mxu0 0
    %150 = vmatprep.subr.bf16.mxu0 0
    %151 = vmatpush2.bf16.msra.mxu0 0
    %152 = vmatprep.subr.bf16.mxu0 0
    %153 = vmatpush2.bf16.msra.mxu0 0
    %154 = vmatprep.mubr.bf16.mxu0 0
    %155 = vmatmul.mubr.bf16.gmra.mxu0 %v50
    %v156 = vpop.f32.mrf.mxu0
    %v157 = vadd.f32 %v72, %v156
    %v158 = vpop.f32.mrf.mxu0
    %v159 = vpop.f32.mrf.mxu0
    %v160 = vpop.f32.mrf.mxu0
    %161 = vdwg.mxu0
    %v162 = vmax.f32 %v157, 0.0
    %v163 = vpack.c.bf16 %v162, %v162
    %v164 = vld [vmem:[#allocation5] sm:$0xf]
    %v165 = vld [vmem:[#allocation5 + $0x4] sm:$0xf]
    %v166 = vld [vmem:[#allocation5 + $0x8] sm:$0xf]
    %v167 = vld [vmem:[#allocation5 + $0xc] sm:$0xf]
    %v168 = vld [vmem:[#allocation5 + $0x10] sm:$0xf]
    %v169 = vld [vmem:[#allocation5 + $0x14] sm:$0xf]
    %v170 = vld [vmem:[#allocation5 + $0x18] sm:$0xf]
    %v171 = vld [vmem:[#allocation5 + $0x1c] sm:$0xf]
    %v172 = vld [vmem:[#allocation5 + $0x20] sm:$0xf]
    %v173 = vld [vmem:[#allocation5 + $0x24] sm:$0xf]
    %v174 = vld [vmem:[#allocation5 + $0x28] sm:$0xf]
    %v175 = vld [vmem:[#allocation5 + $0x2c] sm:$0xf]
    %v176 = vld [vmem:[#allocation5 + $0x30] sm:$0xf]
    %v177 = vld [vmem:[#allocation5 + $0x34] sm:$0xf]
    %v178 = vld [vmem:[#allocation5 + $0x38] sm:$0xf]
    %v179 = vld [vmem:[#allocation5 + $0x3c] sm:$0xf]
    %v180 = vld [vmem:[%s4] sm:$0x1]
    %v182 = vlaneseq
    %v183 = vshrl.u32 %v182, 7
    %v184 = vsub.s32 0, %v183
    %v185 = vrot.slane %v180, %v184
    %v203 = vunpack.c.l.b16 %v164
    %v204 = vunpack.c.l.b16 %v165
    %v205 = vunpack.c.l.b16 %v166
    %v206 = vunpack.c.l.b16 %v167
    %v207 = vunpack.c.l.b16 %v168
    %v208 = vunpack.c.l.b16 %v169
    %v209 = vunpack.c.l.b16 %v170
    %v210 = vunpack.c.l.b16 %v171
    %v211 = vunpack.c.l.b16 %v172
    %v212 = vunpack.c.l.b16 %v173
    %v213 = vunpack.c.l.b16 %v174
    %v214 = vunpack.c.l.b16 %v175
    %v215 = vunpack.c.l.b16 %v176
    %v216 = vunpack.c.l.b16 %v177
    %v217 = vunpack.c.l.b16 %v178
    %v218 = vunpack.c.l.b16 %v179
    %v219 = vpack.c.b16 %v204, %v203
    %v220 = vpack.c.b16 %v206, %v205
    %v221 = vpack.c.b16 %v208, %v207
    %v222 = vpack.c.b16 %v210, %v209
    %v223 = vpack.c.b16 %v212, %v211
    %v224 = vpack.c.b16 %v214, %v213
    %v225 = vpack.c.b16 %v216, %v215
    %v226 = vpack.c.b16 %v218, %v217
    %235 = vmatprep.subr.bf16.mxu0 0
    %236 = vmatpush1.bf16.msra.mxu0 %v226
    %237 = vmatprep.subr.bf16.mxu0 0
    %238 = vmatpush1.bf16.msra.mxu0 %v225
    %239 = vmatprep.subr.bf16.mxu0 0
    %240 = vmatpush1.bf16.msra.mxu0 %v224
    %241 = vmatprep.subr.bf16.mxu0 0
    %242 = vmatpush1.bf16.msra.mxu0 %v223
    %243 = vmatprep.subr.bf16.mxu0 0
    %244 = vmatpush1.bf16.msra.mxu0 %v222
    %245 = vmatprep.subr.bf16.mxu0 0
    %246 = vmatpush1.bf16.msra.mxu0 %v221
    %247 = vmatprep.subr.bf16.mxu0 0
    %248 = vmatpush1.bf16.msra.mxu0 %v220
    %249 = vmatprep.subr.bf16.mxu0 0
    %250 = vmatpush1.bf16.msra.mxu0 %v219
    %251 = vmatprep.subr.bf16.mxu0 0
    %252 = vmatpush2.bf16.msra.mxu0 0
    %253 = vmatprep.subr.bf16.mxu0 0
    %254 = vmatpush2.bf16.msra.mxu0 0
    %255 = vmatprep.subr.bf16.mxu0 0
    %256 = vmatpush2.bf16.msra.mxu0 0
    %257 = vmatprep.subr.bf16.mxu0 0
    %258 = vmatpush2.bf16.msra.mxu0 0
    %259 = vmatprep.subr.bf16.mxu0 0
    %260 = vmatpush2.bf16.msra.mxu0 0
    %261 = vmatprep.subr.bf16.mxu0 0
    %262 = vmatpush2.bf16.msra.mxu0 0
    %263 = vmatprep.subr.bf16.mxu0 0
    %264 = vmatpush2.bf16.msra.mxu0 0
    %265 = vmatprep.subr.bf16.mxu0 0
    %266 = vmatpush2.bf16.msra.mxu0 0
    %267 = vmatprep.mubr.bf16.mxu0 0
    %268 = vmatmul.mubr.bf16.gmra.mxu0 %v163
    %v269 = vpop.f32.mrf.mxu0
    %v270 = vadd.f32 %v185, %v269
    %v271 = vpop.f32.mrf.mxu0
    %v272 = vpop.f32.mrf.mxu0
    %v273 = vpop.f32.mrf.mxu0
    %274 = vdwg.mxu0
    %275 = vst [vmem:[#allocation7] sm:$0xff] %v270
    // Predicated region
    $region30: #{_forward_impl.1} parent=1 // pred_check
      _
    $region31: #{_forward_impl.1} parent=1 // pred_check_branch
      %277 = sbr.rel (0) target = $region33
    $region32: #{_forward_impl.1} parent=1 // pred_region
      %s279 = ssub.s32 128, 128
      %280 = vsyncadd [#allocation4], %s279
      %s282 = sshll.u32 [#allocation7], 4
      %s283 = int_to_ptr.vmem [resolvable:$true] %s282
      %285 = dma.vmem_to_hbm [thread:$0]  %s283, 128, %s5, [#allocation4]
    $region33: #{_forward_impl.1} parent=1 // pred_fallthru
      _
    // Predicated region
    $region34: #{_forward_impl.1} parent=1 // pred_check
      _
    $region35: #{_forward_impl.1} parent=1 // pred_check_branch
      %287 = sbr.rel (0) target = $region37
    $region36: #{_forward_impl.1} parent=1 // pred_region
      %288 = dma.done [#allocation4], 128
    $region37: #{_forward_impl.1} parent=1 // pred_fallthru
      _
    %289 = vsyncpa [#allocation3], 1
    %290 = vsyncpa [#allocation6], 1
    %291 = vsyncpa [#allocation4], 1

</llo_original>
